<compile_context>
chip_gen: v5e
topology: v5e:2x2
jax: 0.10.0
libtpu: 0.0.40
codegen_flags: <defaults>
</compile_context>

<pallas_src>
import jax
import jax.numpy as jnp
from jax.experimental import pallas as pl
from jax.experimental.pallas import tpu as pltpu

EPS = 1e-12


def _round_up(x, m):
    return ((x + m - 1) // m) * m


def _make_kernel(h_actual):
    inv_h = 1.0 / float(h_actual)

    def kernel(h_ref, inp_ref, w_ref, p_ref, o_ref):
        x = h_ref[...]
        w = w_ref[...]
        # dense: x @ W (W already [in, out]) -> f32 accumulation on the MXU.
        y = jnp.dot(x, w, preferred_element_type=jnp.float32)

        bias = p_ref[0:1, :]    # (1, H_pad) f32
        gamma = p_ref[1:2, :]
        beta = p_ref[2:3, :]

        # TODO(synk): dropout is identity here (inference); training-mode dropout not implemented.
        z = y + bias + inp_ref[...].astype(jnp.float32)

        # Single-pass LayerNorm statistics. Padded lanes of z are exactly zero
        # (zero-padded weight columns / bias / residual), so plain lane sums
        # divided by the true H give the correct mean / E[z^2].
        s1 = jnp.sum(z, axis=-1, keepdims=True)
        s2 = jnp.sum(z * z, axis=-1, keepdims=True)
        mean = s1 * inv_h
        var = jnp.maximum(s2 * inv_h - mean * mean, 0.0)
        inv_std = jax.lax.rsqrt(var + EPS)

        o_ref[...] = ((z - mean) * inv_std * gamma + beta).astype(o_ref.dtype)

    return kernel


def bert_self_output(hidden_states, input_tensor, weight, bias, gamma, beta,
                     *, tm=256, weight_dtype=jnp.bfloat16, out_dtype=None,
                     vmem_limit_bytes=None):
    """hidden_states, input_tensor: [N, H] (N = batch*seq).
    weight: [H, H] in torch nn.Linear layout (out = x @ weight.T + bias).
    Returns [N, H] in `out_dtype` (defaults to hidden_states.dtype).

    tm: row tile (multiple of 8). 256 is a safe default on all generations;
        512-1024 pays off on v6e (raise vmem_limit_bytes), keep <=512 on v7x.
    weight_dtype: matmul input dtype for W and hidden_states (default bf16);
        accumulation and the LayerNorm epilogue stay in f32. Pass None for f32.
    """
    N, H = hidden_states.shape
    if out_dtype is None:
        out_dtype = hidden_states.dtype

    tm = max(8, (int(tm) // 8) * 8)
    H_pad = _round_up(H, 128)              # lane-dense (unmasked) stores
    tm_eff = min(tm, _round_up(N, 8))      # clamp tile for small N
    N_pad = _round_up(N, tm_eff)

    # Pre-transpose the weight once (wrapper-side, amortized) -> [in, out].
    w_t = weight.T

    def pad2(x, rows, cols):
        pr, pc = rows - x.shape[0], cols - x.shape[1]
        return jnp.pad(x, ((0, pr), (0, pc))) if (pr or pc) else x

    h_p = pad2(hidden_states, N_pad, H_pad)
    inp_p = pad2(input_tensor, N_pad, H_pad)
    w_p = pad2(w_t, H_pad, H_pad)

    # bias / gamma / beta packed into one (8, H_pad) f32 constant block (rows 0..2).
    params = jnp.zeros((8, H_pad), jnp.float32)
    params = params.at[0, :H].set(bias.astype(jnp.float32))
    params = params.at[1, :H].set(gamma.astype(jnp.float32))
    params = params.at[2, :H].set(beta.astype(jnp.float32))

    if weight_dtype is not None:
        # bf16 matmul inputs halve weight/activation DMA bytes and hit the MXU's
        # native bf16 rate; f32 accumulation + f32 LayerNorm epilogue are kept.
        if w_p.dtype != weight_dtype:
            w_p = w_p.astype(weight_dtype)
        if h_p.dtype != weight_dtype:
            h_p = h_p.astype(weight_dtype)

    h_b = h_p.dtype.itemsize
    in_b = inp_p.dtype.itemsize
    w_b = w_p.dtype.itemsize
    o_b = jnp.dtype(out_dtype).itemsize

    if vmem_limit_bytes is None:
        need = (2 * tm_eff * H_pad * (h_b + in_b + o_b)   # double-buffered row tiles
                + H_pad * H_pad * w_b                     # single-buffered weight
                + 2 * 8 * H_pad * 4                       # packed params
                + 4 * tm_eff * H_pad * 4                  # f32 epilogue temporaries
                + (4 << 20))                              # headroom
        vmem_limit_bytes = min(max(need, 32 << 20), 64 << 20)

    cost = pl.CostEstimate(
        flops=2 * N_pad * H_pad * H_pad + 8 * N_pad * H_pad,
        transcendentals=N_pad,
        bytes_accessed=(N_pad * H_pad * (h_b + in_b + o_b)
                        + H_pad * H_pad * w_b
                        + 8 * H_pad * 4),
    )

    row_spec = pl.BlockSpec((tm_eff, H_pad), lambda i: (i, 0))

    def const_spec(shape):
        # constant index_map -> resident across the grid; single buffer saves VMEM
        return pl.BlockSpec(shape, lambda i: (0, 0), pipeline_mode=pl.Buffered(1))

    out_p = pl.pallas_call(
        _make_kernel(H),
        out_shape=jax.ShapeDtypeStruct((N_pad, H_pad), out_dtype),
        grid_spec=pltpu.PrefetchScalarGridSpec(
            num_scalar_prefetch=0,
            grid=(N_pad // tm_eff,),
            in_specs=[
                row_spec,                      # hidden_states row tile
                row_spec,                      # input_tensor row tile (residual)
                const_spec((H_pad, H_pad)),    # weight [in, out] (resident)
                const_spec((8, H_pad)),        # packed bias/gamma/beta
            ],
            out_specs=row_spec,
        ),
        compiler_params=pltpu.CompilerParams(
            dimension_semantics=("parallel",),   # lets v7x shard rows over 2 TCs
            vmem_limit_bytes=int(vmem_limit_bytes),
        ),
        cost_estimate=cost,
    )(h_p, inp_p, w_p, params)

    if N_pad == N and H_pad == H:
        return out_p
    return out_p[:N, :H]


def reference(hidden_states, input_tensor, weight, bias, gamma, beta):
    y = hidden_states @ weight.T + bias
    z = y + input_tensor
    u = jnp.mean(z, axis=-1, keepdims=True)
    s = jnp.mean((z - u) ** 2, axis=-1, keepdims=True)
    n = (z - u) / jnp.sqrt(s + EPS)
    return gamma * n + beta


if __name__ == "__main__":
    key = jax.random.PRNGKey(0)
    k1, k2, k3, k4 = jax.random.split(key, 4)

    batch, seq, hidden = 2, 8, 32   # small shapes consistent with the module
    N = batch * seq

    hidden_states = jax.random.normal(k1, (N, hidden), dtype=jnp.float32)
    input_tensor = jax.random.normal(k2, (N, hidden), dtype=jnp.float32)

    # deterministic parameter init (nn.Linear(H, H), BERTLayerNorm(H))
    weight = jax.random.normal(k3, (hidden, hidden), dtype=jnp.float32) * 0.02
    bias = jax.random.normal(k4, (hidden,), dtype=jnp.float32) * 0.02
    gamma = jnp.ones((hidden,), dtype=jnp.float32)
    beta = jnp.zeros((hidden,), dtype=jnp.float32)

    ref = reference(hidden_states, input_tensor, weight, bias, gamma, beta)

    # f32 matmul path: tight numerical check.
    out_f32 = jax.block_until_ready(
        bert_self_output(hidden_states, input_tensor, weight, bias, gamma, beta,
                         weight_dtype=None))
    assert out_f32.shape == (N, hidden)
    assert jnp.allclose(out_f32, ref, atol=1e-5, rtol=1e-5), "f32 path mismatch vs reference"

    # default bf16-matmul path (f32 accumulation + f32 LayerNorm): looser check.
    out_bf16 = jax.block_until_ready(
        bert_self_output(hidden_states, input_tensor, weight, bias, gamma, beta))
    assert out_bf16.shape == (N, hidden)
    assert jnp.allclose(out_bf16, ref, atol=3e-2, rtol=3e-2), "bf16 path mismatch vs reference"

    print("KERNEL_OK")
</pallas_src>

<mosaic_0001>
module attributes {stable_mosaic.version = 11 : i64} {
  func.func @kernel(%arg0: i32, %arg1: memref<16x128xf32, #tpu.memory_space<vmem>>, %arg2: memref<16x128xf32, #tpu.memory_space<vmem>>, %arg3: memref<128x128xf32, #tpu.memory_space<vmem>>, %arg4: memref<8x128xf32, #tpu.memory_space<vmem>>, %arg5: memref<16x128xf32, #tpu.memory_space<vmem>>) attributes {dimension_semantics = [#tpu.dimension_semantics<parallel>], iteration_bounds = array<i64: 1>, scalar_prefetch = 0 : i64, scratch_operands = 0 : i64, tpu.core_type = #tpu.core_type<tc>, window_params = [{transform_indices = @transform_0, window_bounds = array<i64: 16, 128>}, {transform_indices = @transform_1, window_bounds = array<i64: 16, 128>}, {pipeline_mode = #tpu.pipeline_mode<synchronous>, transform_indices = @transform_2, window_bounds = array<i64: 128, 128>}, {pipeline_mode = #tpu.pipeline_mode<synchronous>, transform_indices = @transform_3, window_bounds = array<i64: 8, 128>}, {transform_indices = @transform_4, window_bounds = array<i64: 16, 128>}]} {
    %c0 = arith.constant 0 : index
    %c0_0 = arith.constant 0 : index
    %0 = vector.load %arg1[%c0, %c0_0] : memref<16x128xf32, #tpu.memory_space<vmem>>, vector<16x128xf32>
    %c0_1 = arith.constant 0 : index
    %c0_2 = arith.constant 0 : index
    %1 = vector.load %arg3[%c0_1, %c0_2] : memref<128x128xf32, #tpu.memory_space<vmem>>, vector<128x128xf32>
    %cst = arith.constant dense<0.000000e+00> : vector<16x128xf32>
    %2 = tpu.matmul %0, %1, %cst {dimension_numbers = #tpu.dot_dimension_numbers<[1], [0], [0], [1], [0, 0, 1, 1], [], []>} : vector<16x128xf32>, vector<128x128xf32>, vector<16x128xf32> -> vector<16x128xf32>
    %c0_3 = arith.constant 0 : index
    %c0_4 = arith.constant 0 : index
    %3 = vector.load %arg4[%c0_3, %c0_4] : memref<8x128xf32, #tpu.memory_space<vmem>>, vector<1x128xf32>
    %c1 = arith.constant 1 : index
    %c0_5 = arith.constant 0 : index
    %4 = vector.load %arg4[%c1, %c0_5] : memref<8x128xf32, #tpu.memory_space<vmem>>, vector<1x128xf32>
    %c2 = arith.constant 2 : index
    %c0_6 = arith.constant 0 : index
    %5 = vector.load %arg4[%c2, %c0_6] : memref<8x128xf32, #tpu.memory_space<vmem>>, vector<1x128xf32>
    %6 = vector.broadcast %3 : vector<1x128xf32> to vector<16x128xf32>
    %7 = arith.addf %2, %6 : vector<16x128xf32>
    %c0_7 = arith.constant 0 : index
    %c0_8 = arith.constant 0 : index
    %8 = vector.load %arg2[%c0_7, %c0_8] : memref<16x128xf32, #tpu.memory_space<vmem>>, vector<16x128xf32>
    %9 = arith.addf %7, %8 : vector<16x128xf32>
    %cst_9 = arith.constant dense<0.000000e+00> : vector<16xf32>
    %10 = vector.multi_reduction <add>, %9, %cst_9 [1] : vector<16x128xf32> to vector<16xf32>
    %11 = vector.shape_cast %10 : vector<16xf32> to vector<16x1xf32>
    %12 = arith.mulf %9, %9 : vector<16x128xf32>
    %cst_10 = arith.constant dense<0.000000e+00> : vector<16xf32>
    %13 = vector.multi_reduction <add>, %12, %cst_10 [1] : vector<16x128xf32> to vector<16xf32>
    %14 = vector.shape_cast %13 : vector<16xf32> to vector<16x1xf32>
    %cst_11 = arith.constant 3.125000e-02 : f32
    %15 = vector.broadcast %cst_11 : f32 to vector<16x1xf32>
    %16 = arith.mulf %11, %15 : vector<16x1xf32>
    %cst_12 = arith.constant 3.125000e-02 : f32
    %17 = vector.broadcast %cst_12 : f32 to vector<16x1xf32>
    %18 = arith.mulf %14, %17 : vector<16x1xf32>
    %19 = arith.mulf %16, %16 : vector<16x1xf32>
    %20 = arith.subf %18, %19 : vector<16x1xf32>
    %cst_13 = arith.constant 0.000000e+00 : f32
    %21 = vector.broadcast %cst_13 : f32 to vector<16x1xf32>
    %22 = arith.maximumf %20, %21 : vector<16x1xf32>
    %cst_14 = arith.constant 9.99999996E-13 : f32
    %23 = vector.broadcast %cst_14 : f32 to vector<16x1xf32>
    %24 = arith.addf %22, %23 : vector<16x1xf32>
    %25 = math.rsqrt %24 : vector<16x1xf32>
    %26 = vector.broadcast %16 : vector<16x1xf32> to vector<16x128xf32>
    %27 = arith.subf %9, %26 : vector<16x128xf32>
    %28 = vector.broadcast %25 : vector<16x1xf32> to vector<16x128xf32>
    %29 = arith.mulf %27, %28 : vector<16x128xf32>
    %30 = vector.broadcast %4 : vector<1x128xf32> to vector<16x128xf32>
    %31 = arith.mulf %29, %30 : vector<16x128xf32>
    %32 = vector.broadcast %5 : vector<1x128xf32> to vector<16x128xf32>
    %33 = arith.addf %31, %32 : vector<16x128xf32>
    %c0_15 = arith.constant 0 : index
    %c0_16 = arith.constant 0 : index
    %34 = vector.load %arg5[%c0_15, %c0_16] : memref<16x128xf32, #tpu.memory_space<vmem>>, vector<16x128xf32>
    tpu.vector_store %arg5[%c0_15, %c0_16], %33 {strides = array<i32>} : memref<16x128xf32, #tpu.memory_space<vmem>>, vector<16x128xf32>,
    return
  }
  func.func @transform_0(%arg0: i32) -> (i32, i32) {
    %c0_i32 = arith.constant 0 : i32
    %c0_i32_0 = arith.constant 0 : i32
    return %arg0, %c0_i32 : i32, i32
  }
  func.func @transform_1(%arg0: i32) -> (i32, i32) {
    %c0_i32 = arith.constant 0 : i32
    %c0_i32_0 = arith.constant 0 : i32
    return %arg0, %c0_i32 : i32, i32
  }
  func.func @transform_2(%arg0: i32) -> (i32, i32) {
    %c0_i32 = arith.constant 0 : i32
    %c0_i32_0 = arith.constant 0 : i32
    %c0_i32_1 = arith.constant 0 : i32
    return %c0_i32, %c0_i32_0 : i32, i32
  }
  func.func @transform_3(%arg0: i32) -> (i32, i32) {
    %c0_i32 = arith.constant 0 : i32
    %c0_i32_0 = arith.constant 0 : i32
    %c0_i32_1 = arith.constant 0 : i32
    return %c0_i32, %c0_i32_0 : i32, i32
  }
  func.func @transform_4(%arg0: i32) -> (i32, i32) {
    %c0_i32 = arith.constant 0 : i32
    %c0_i32_0 = arith.constant 0 : i32
    return %arg0, %c0_i32 : i32, i32
  }
}

</mosaic_0001>

<llo_original>
// kernel: tpu_custom_call.1
$region0: #{tpu_custom_call.1}
  #allocation0 [shape = 'u32[]', space=smem, size = 0x4, offset = 0x4, fixed_abs, tag = 'smem constant byte address 0x4 - core index']
  #allocation1 [shape = 'u32[72,128]{1,0:T(1,128)}', space=vmem, size = 0x9000, scoped, tag = 'internal scratch']
  %s0 = inlined_call_operand.hbm [shape: f32[16,128], index: 0, kind: input, shape index: {}]
  %s1 = inlined_call_operand.hbm [shape: f32[16,128], index: 1, kind: input, shape index: {}]
  %s2 = inlined_call_operand.hbm [shape: f32[128,128], index: 2, kind: input, shape index: {}]
  %s3 = inlined_call_operand.hbm [shape: f32[8,128], index: 3, kind: input, shape index: {}]
  %s4 = inlined_call_operand.hbm [shape: f32[16,128], index: 4, kind: output, shape index: {}]
  %s5 = sld [smem:[#allocation0]]
  $region42: #{tpu_custom_call.1} parent=0
    _
  %s7 = ssub.s32 1, %s5
  %s8 = scalar_select 0, %s7, %s5
  $region1: #{tpu_custom_call.1} parent=0
    #allocation2 [shape = 'u8[8192]{0}', space=vmem, size = 0x2000, scoped, tag = 'input window, operand 0, single buffered']
    #allocation3 [shape = 's32[1]{0}', space=sflag, size = 0x4, scoped, tag = 'scoped memory for tpu_custom_call.1']
    #allocation4 [shape = 's32[1]{0}', space=sflag, size = 0x4, scoped, tag = 'scoped memory for tpu_custom_call.1']
    #allocation5 [shape = 'u8[8192]{0}', space=vmem, size = 0x2000, scoped, tag = 'input window, operand 1, single buffered']
    #allocation6 [shape = 's32[1]{0}', space=sflag, size = 0x4, scoped, tag = 'scoped memory for tpu_custom_call.1']
    #allocation7 [shape = 'u8[65536]{0}', space=vmem, size = 0x10000, scoped, tag = 'input window, operand 2, single buffered']
    #allocation8 [shape = 'u8[4096]{0}', space=vmem, size = 0x1000, scoped, tag = 'input window, operand 3, single buffered']
    #allocation9 [shape = 's32[1]{0}', space=sflag, size = 0x4, scoped, tag = 'scoped memory for tpu_custom_call.1']
    #allocation10 [shape = 'u8[8192]{0}', space=vmem, size = 0x2000, scoped, tag = 'output window, operand 0, single buffered']
    %9 = vsyncpa [#allocation3], 0
    %10 = vsyncpa [#allocation6], 0
    %11 = vsyncpa [#allocation9], 0
    %12 = vsyncpa [#allocation4], 0
    // Predicated region
    $region2: #{tpu_custom_call.1} parent=1 // pred_check
      _
    $region3: #{tpu_custom_call.1} parent=1 // pred_check_branch
      %14 = sbr.rel (0) target = $region5
    $region4: #{tpu_custom_call.1} parent=1 // pred_region
      %16 = vsyncadd [#allocation3], 0
      %s17 = sshll.u32 %s0, 4
      %s18 = int_to_ptr.hbm [resolvable:$true] %s17
      %s19 = sshll.u32 [#allocation2], 4
      %s20 = int_to_ptr.vmem [resolvable:$true] %s19
      %25 = dma.hbm_to_vmem [thread:$0]  %s18, 256, %s20, [#allocation3], 128, 128, 8
    $region5: #{tpu_custom_call.1} parent=1 // pred_fallthru
      _
    // Predicated region
    $region6: #{tpu_custom_call.1} parent=1 // pred_check
      _
    $region7: #{tpu_custom_call.1} parent=1 // pred_check_branch
      %27 = sbr.rel (0) target = $region9
    $region8: #{tpu_custom_call.1} parent=1 // pred_region
      %29 = vsyncadd [#allocation6], 0
      %s30 = sshll.u32 %s1, 4
      %s31 = int_to_ptr.hbm [resolvable:$true] %s30
      %s32 = sshll.u32 [#allocation5], 4
      %s33 = int_to_ptr.vmem [resolvable:$true] %s32
      %38 = dma.hbm_to_vmem [thread:$0]  %s31, 256, %s33, [#allocation6], 128, 128, 8
    $region9: #{tpu_custom_call.1} parent=1 // pred_fallthru
      _
    // Predicated region
    $region10: #{tpu_custom_call.1} parent=1 // pred_check
      _
    $region11: #{tpu_custom_call.1} parent=1 // pred_check_branch
      %40 = sbr.rel (0) target = $region13
    $region12: #{tpu_custom_call.1} parent=1 // pred_region
      %42 = vsyncadd [#allocation6], 0
      %s43 = sshll.u32 %s2, 4
      %s44 = int_to_ptr.hbm [resolvable:$true] %s43
      %s45 = sshll.u32 [#allocation7], 4
      %s46 = int_to_ptr.vmem [resolvable:$true] %s45
      %51 = dma.hbm_to_vmem [thread:$0]  %s44, 2048, %s46, [#allocation6], 128, 128, 8
    $region13: #{tpu_custom_call.1} parent=1 // pred_fallthru
      _
    // Predicated region
    $region14: #{tpu_custom_call.1} parent=1 // pred_check
      _
    $region15: #{tpu_custom_call.1} parent=1 // pred_check_branch
      %53 = sbr.rel (0) target = $region17
    $region16: #{tpu_custom_call.1} parent=1 // pred_region
      %55 = vsyncadd [#allocation9], 0
      %s57 = sshll.u32 %s3, 4
      %s58 = int_to_ptr.hbm [resolvable:$true] %s57
      %s59 = sshll.u32 [#allocation8], 4
      %s60 = int_to_ptr.vmem [resolvable:$true] %s59
      %62 = dma.hbm_to_vmem [thread:$0]  %s58, 128, %s60, [#allocation9]
    $region17: #{tpu_custom_call.1} parent=1 // pred_fallthru
      _
    // Predicated region
    $region18: #{tpu_custom_call.1} parent=1 // pred_check
      _
    $region19: #{tpu_custom_call.1} parent=1 // pred_check_branch
      %64 = sbr.rel (0) target = $region21
    $region20: #{tpu_custom_call.1} parent=1 // pred_region
      %66 = dma.done [#allocation3], 256
    $region21: #{tpu_custom_call.1} parent=1 // pred_fallthru
      _
    // Predicated region
    $region22: #{tpu_custom_call.1} parent=1 // pred_check
      _
    $region23: #{tpu_custom_call.1} parent=1 // pred_check_branch
      %68 = sbr.rel (0) target = $region25
    $region24: #{tpu_custom_call.1} parent=1 // pred_region
      %70 = dma.done [#allocation6], 256
    $region25: #{tpu_custom_call.1} parent=1 // pred_fallthru
      _
    // Predicated region
    $region26: #{tpu_custom_call.1} parent=1 // pred_check
      _
    $region27: #{tpu_custom_call.1} parent=1 // pred_check_branch
      %72 = sbr.rel (0) target = $region29
    $region28: #{tpu_custom_call.1} parent=1 // pred_region
      %74 = dma.done [#allocation6], 2048
    $region29: #{tpu_custom_call.1} parent=1 // pred_fallthru
      _
    // Predicated region
    $region30: #{tpu_custom_call.1} parent=1 // pred_check
      _
    $region31: #{tpu_custom_call.1} parent=1 // pred_check_branch
      %76 = sbr.rel (0) target = $region33
    $region32: #{tpu_custom_call.1} parent=1 // pred_region
      %78 = dma.done [#allocation9], 128
    $region33: #{tpu_custom_call.1} parent=1 // pred_fallthru
      _
    %v79 = vld [vmem:[#allocation2] sm:$0xff]
    %v80 = vld [vmem:[#allocation2 + $0x8] sm:$0xff]
    %v81 = vld [vmem:[#allocation7] sm:$0xff]
    %v82 = vld [vmem:[#allocation7 + $0x8] sm:$0xff]
    %v83 = vld [vmem:[#allocation7 + $0x10] sm:$0xff]
    %v84 = vld [vmem:[#allocation7 + $0x18] sm:$0xff]
    %v85 = vld [vmem:[#allocation7 + $0x20] sm:$0xff]
    %v86 = vld [vmem:[#allocation7 + $0x28] sm:$0xff]
    %v87 = vld [vmem:[#allocation7 + $0x30] sm:$0xff]
    %v88 = vld [vmem:[#allocation7 + $0x38] sm:$0xff]
    %v89 = vld [vmem:[#allocation7 + $0x40] sm:$0xff]
    %v90 = vld [vmem:[#allocation7 + $0x48] sm:$0xff]
    %v91 = vld [vmem:[#allocation7 + $0x50] sm:$0xff]
    %v92 = vld [vmem:[#allocation7 + $0x58] sm:$0xff]
    %v93 = vld [vmem:[#allocation7 + $0x60] sm:$0xff]
    %v94 = vld [vmem:[#allocation7 + $0x68] sm:$0xff]
    %v95 = vld [vmem:[#allocation7 + $0x70] sm:$0xff]
    %v96 = vld [vmem:[#allocation7 + $0x78] sm:$0xff]
    %v97 = vld [vmem:[#allocation8] sm:$0x1]
    %v98 = vld [vmem:[#allocation8 + $0x1] sm:$0x1]
    %v99 = vld [vmem:[#allocation8 + $0x2] sm:$0x1]
    %v100 = vperm.slane %v97, 0
    %101 = vmatpush.msra.mxu0 %v96
    %102 = vmatpush.msra.mxu0 %v95
    %103 = vmatpush.msra.mxu0 %v94
    %104 = vmatpush.msra.mxu0 %v93
    %105 = vmatpush.msra.mxu0 %v92
    %106 = vmatpush.msra.mxu0 %v91
    %107 = vmatpush.msra.mxu0 %v90
    %108 = vmatpush.msra.mxu0 %v89
    %109 = vmatpush.msra.mxu0 %v88
    %110 = vmatpush.msra.mxu0 %v87
    %111 = vmatpush.msra.mxu0 %v86
    %112 = vmatpush.msra.mxu0 %v85
    %113 = vmatpush.msra.mxu0 %v84
    %114 = vmatpush.msra.mxu0 %v83
    %115 = vmatpush.msra.mxu0 %v82
    %116 = vmatpush.msra.mxu0 %v81
    %117 = vmatmul.f32.gmra.mxu0 %v79
    %v118 = vpop.f32.mrf.mxu0
    %v119 = vadd.f32 %v100, %v118
    %120 = vmatmul.f32.gmra.mxu0 %v80
    %v121 = vpop.f32.mrf.mxu0
    %v122 = vadd.f32 %v100, %v121
    %123 = vdwg.mxu0
    %v124 = vld [vmem:[#allocation5] sm:$0xff]
    %v125 = vld [vmem:[#allocation5 + $0x8] sm:$0xff]
    %v126 = vadd.f32 %v119, %v124
    %v127 = vadd.f32 %v122, %v125
    %128 = vadd.xlane.f32.xlu0 %v126
    %v129 = vpop.xlane.xlu0 %128
    %130 = vadd.xlane.f32.xlu0 %v127
    %v131 = vpop.xlane.xlu0 %130
    %v132 = vmul.f32 %v126, %v126
    %v133 = vmul.f32 %v127, %v127
    %134 = vadd.xlane.f32.xlu0 %v132
    %v135 = vpop.xlane.xlu0 %134
    %136 = vadd.xlane.f32.xlu0 %v133
    %v137 = vpop.xlane.xlu0 %136
    %v138 = vmul.f32 %v129, 0.03125
    %v139 = vmul.f32 %v131, 0.03125
    %v140 = vmul.f32 %v135, 0.03125
    %v141 = vmul.f32 %v137, 0.03125
    %v142 = vmul.f32 %v138, %v138
    %v143 = vmul.f32 %v139, %v139
    %v144 = vsub.f32 %v140, %v142
    %v145 = vsub.f32 %v141, %v143
    %v146 = vmax.f32 %v144, 0.0
    %v147 = vmax.f32 %v145, 0.0
    %v148 = vadd.f32 %v146, 1e-12
    %v149 = vadd.f32 %v147, 1e-12
    %v150 = vrsqrt.pop %v148
    %v151 = vmul.f32 %v150, %v148
    %v152 = vmul.f32 %v151, %v150
    %v153 = vmul.f32 0.5, %v152
    %v154 = vsub.f32 1.5, %v153
    %v155 = vmul.f32 %v150, %v154
    %vm156 = vweird.f32 %v148
    %vm157 = vweird.f32 %v150
    %vm158 = vmor %vm156, %vm157
    %v159 = vsel %vm158, %v150, %v155
    %v160 = vrsqrt.pop %v149
    %v161 = vmul.f32 %v160, %v149
    %v162 = vmul.f32 %v161, %v160
    %v163 = vmul.f32 0.5, %v162
    %v164 = vsub.f32 1.5, %v163
    %v165 = vmul.f32 %v160, %v164
    %vm166 = vweird.f32 %v149
    %vm167 = vweird.f32 %v160
    %vm168 = vmor %vm166, %vm167
    %v169 = vsel %vm168, %v160, %v165
    %v170 = vsub.f32 %v126, %v138
    %v171 = vsub.f32 %v127, %v139
    %v172 = vmul.f32 %v170, %v159
    %v173 = vmul.f32 %v171, %v169
    %v174 = vperm.slane %v98, 0
    %v175 = vmul.f32 %v172, %v174
    %v176 = vmul.f32 %v173, %v174
    %v177 = vperm.slane %v99, 0
    %v178 = vadd.f32 %v175, %v177
    %v179 = vadd.f32 %v176, %v177
    %180 = vst [vmem:[#allocation10] sm:$0xff] %v178
    %181 = vst [vmem:[#allocation10 + $0x8] sm:$0xff] %v179
    // Predicated region
    $region34: #{tpu_custom_call.1} parent=1 // pred_check
      _
    $region35: #{tpu_custom_call.1} parent=1 // pred_check_branch
      %183 = sbr.rel (0) target = $region37
    $region36: #{tpu_custom_call.1} parent=1 // pred_region
      %185 = vsyncadd [#allocation4], 0
      %s186 = sshll.u32 [#allocation10], 4
      %s187 = int_to_ptr.vmem [resolvable:$true] %s186
      %s188 = sshll.u32 %s4, 4
      %s189 = int_to_ptr.hbm [resolvable:$true] %s188
      %194 = dma.vmem_to_hbm [thread:$0]  %s187, 256, %s189, [#allocation4], 128, 128, 8
    $region37: #{tpu_custom_call.1} parent=1 // pred_fallthru
      _
    // Predicated region
    $region38: #{tpu_custom_call.1} parent=1 // pred_check
      _
    $region39: #{tpu_custom_call.1} parent=1 // pred_check_branch
      %196 = sbr.rel (0) target = $region41
    $region40: #{tpu_custom_call.1} parent=1 // pred_region
      %198 = dma.done [#allocation4], 256
    $region41: #{tpu_custom_call.1} parent=1 // pred_fallthru
      _
    %199 = vsyncpa [#allocation3], 1
    %200 = vsyncpa [#allocation6], 1
    %201 = vsyncpa [#allocation9], 1
    %202 = vsyncpa [#allocation4], 1

</llo_original>
